<compile_context>
chip_gen: v7x
topology: tpu7x:2x2x1
jax: 0.10.0
libtpu: 0.0.40
codegen_flags: <defaults>
</compile_context>

<pallas_src>
import numpy as np
import jax
import jax.numpy as jnp
from jax.experimental import pallas as pl
from jax.experimental.pallas import tpu as pltpu

NUM_CLASSES = 10


# --------------------------------------------------------------------------
# Kernels
# --------------------------------------------------------------------------
def out_transform_kernel(xT_ref, w_ref, b_ref, oT_ref):
    # xT_ref: (C, TB) logits tile, batch on lanes (lane-dense loads/stores).
    # w_ref : (C, C)  weight in PyTorch (out, in) convention; yT = W @ xT.
    # b_ref : (C, 1)  bias column, lane-broadcast across the batch.
    y = jnp.dot(w_ref[...], xT_ref[...], preferred_element_type=jnp.float32)
    oT_ref[...] = (y + b_ref[...]).astype(oT_ref.dtype)


def copy_kernel(x_ref, o_ref):
    # Lane-dense flat copy for the identity / zero-bias configuration.
    o_ref[...] = x_ref[...]


# --------------------------------------------------------------------------
# Tiling helpers
# --------------------------------------------------------------------------
def _round_up(x, m):
    return ((x + m - 1) // m) * m


def _pick_lane_tile(batch, cap=32768):
    """Lane-axis (batch) tile for the transposed (C, B) layout.

    Whole batch when small (block == full dim is always legal); otherwise
    ~ceil(B/2) rounded up to 128 lanes (capped) so the grid has >= 2 steps
    (keeps both v7x TensorCores busy) and each DMA is large.
    """
    if batch <= 512:
        return batch
    return min(cap, _round_up(pl.cdiv(batch, 2), 128))


def _pick_row_tile(rows, cap=8192):
    """Row tile for the flat (rows, 128) copy path."""
    if rows <= 1024:
        return rows
    return min(cap, _round_up(pl.cdiv(rows, 2), 8))


# --------------------------------------------------------------------------
# Forward paths
# --------------------------------------------------------------------------
def _is_identity_transform(weight, bias):
    """True iff params are concrete (not tracers) and W == I, b == 0."""
    try:
        w = np.asarray(jax.device_get(weight))
        b = np.asarray(jax.device_get(bias))
    except Exception:
        return False
    if w.ndim != 2 or w.shape[0] != w.shape[1]:
        return False
    return bool(np.array_equal(w, np.eye(w.shape[0], dtype=w.dtype)) and not np.any(b))


def _identity_forward(logits, *, row_tile=8192):
    """W = I, b = 0: no matmul — lane-dense flat copy (or pass-through)."""
    B, C = logits.shape
    total = B * C
    if total % 128 != 0:
        # Can't present a lane-dense flat view; a clone of an immutable JAX
        # array is a no-op, so just hand the input back.
        return logits

    rows = total // 128
    flat = logits.reshape(rows, 128)  # contiguous row-major -> metadata-only reshape
    tr = _pick_row_tile(rows, row_tile)
    grid = (pl.cdiv(rows, tr),)
    itemsize = np.dtype(logits.dtype).itemsize
    cost = pl.CostEstimate(flops=0, transcendentals=0,
                           bytes_accessed=2 * total * itemsize)

    out = pl.pallas_call(
        copy_kernel,
        out_shape=jax.ShapeDtypeStruct((rows, 128), logits.dtype),
        grid=grid,
        in_specs=[pl.BlockSpec((tr, 128), lambda i: (i, 0))],
        out_specs=pl.BlockSpec((tr, 128), lambda i: (i, 0)),
        compiler_params=pltpu.CompilerParams(dimension_semantics=("parallel",)),
        cost_estimate=cost,
    )(flat)
    return out.reshape(B, C)


def _general_forward(logits, weight, bias, *, lane_tile=32768):
    """General weight: transposed (C, B) layout so batch sits on lanes."""
    B, C = logits.shape
    xT = logits.T                     # (C, B): layout plumbing, batch -> lanes
    bcol = bias.reshape(C, 1)         # lane-broadcast inside the kernel

    tb = _pick_lane_tile(B, lane_tile)
    grid = (pl.cdiv(B, tb),)          # ragged last block handled by Pallas

    itemsize = np.dtype(logits.dtype).itemsize
    cost = pl.CostEstimate(
        flops=2 * B * C * C,
        transcendentals=0,
        bytes_accessed=2 * B * C * itemsize
        + C * C * np.dtype(weight.dtype).itemsize
        + C * np.dtype(bias.dtype).itemsize,
    )

    yT = pl.pallas_call(
        out_transform_kernel,
        out_shape=jax.ShapeDtypeStruct((C, B), logits.dtype),
        grid=grid,
        in_specs=[
            # Logits (transposed): tiled over the lane/batch axis -> pipelined DMA.
            pl.BlockSpec((C, tb), lambda i: (0, i)),
            # Weight / bias: same block every step -> VMEM-resident.
            pl.BlockSpec((C, C), lambda i: (0, 0)),
            pl.BlockSpec((C, 1), lambda i: (0, 0)),
        ],
        out_specs=pl.BlockSpec((C, tb), lambda i: (0, i)),
        compiler_params=pltpu.CompilerParams(
            # Independent batch tiles: megacore sharding on v7x, neutral elsewhere.
            dimension_semantics=("parallel",)
        ),
        cost_estimate=cost,
    )(xT, weight, bcol)
    return yT.T


def out_program_forward(logits, weight, bias, *, lane_tile=32768, row_tile=8192):
    """Pallas equivalent of OutProgram.forward: out_transform(logits.clone())."""
    if _is_identity_transform(weight, bias):
        return _identity_forward(logits, row_tile=row_tile)
    return _general_forward(logits, weight, bias, lane_tile=lane_tile)


def init_out_program_params(num_classes=NUM_CLASSES, dtype=jnp.float32):
    # torch.nn.init.eye_(weight); torch.nn.init.constant_(bias, 0)
    weight = jnp.eye(num_classes, dtype=dtype)
    bias = jnp.zeros((num_classes,), dtype=dtype)
    return weight, bias


# --------------------------------------------------------------------------
# Self-test
# --------------------------------------------------------------------------
if __name__ == "__main__":
    key = jax.random.PRNGKey(0)
    k_x, k_x64, k_xl, k_w, k_b = jax.random.split(key, 5)

    weight, bias = init_out_program_params()

    # 1) Module config (W = I, b = 0), tiny batch: pass-through path (80 elems).
    B = 8
    logits = jax.random.normal(k_x, (B, NUM_CLASSES), dtype=jnp.float32)
    out = jax.block_until_ready(out_program_forward(logits, weight, bias))
    ref = logits @ weight.T + bias
    assert out.shape == (B, NUM_CLASSES)
    assert jnp.allclose(out, ref, atol=1e-6), "mismatch (identity, pass-through)"

    # 2) Module config, B*C divisible by 128: lane-dense flat copy kernel.
    B64 = 64
    logits64 = jax.random.normal(k_x64, (B64, NUM_CLASSES), dtype=jnp.float32)
    out64 = jax.block_until_ready(out_program_forward(logits64, weight, bias))
    assert out64.shape == (B64, NUM_CLASSES)
    assert jnp.allclose(out64, logits64, atol=0.0), "mismatch (identity, flat copy)"

    # 3) General weight, small batch: transposed-layout matmul kernel, grid=(1,).
    w_rand = jax.random.normal(k_w, (NUM_CLASSES, NUM_CLASSES), dtype=jnp.float32)
    b_rand = jax.random.normal(k_b, (NUM_CLASSES,), dtype=jnp.float32)
    out_g = jax.block_until_ready(out_program_forward(logits, w_rand, b_rand))
    ref_g = logits @ w_rand.T + b_rand
    assert jnp.allclose(out_g, ref_g, atol=1e-5), "mismatch (general, small)"

    # 4) General weight, ragged batch: exercises >=2 grid steps + partial block.
    BL = 1000
    logits_l = jax.random.normal(k_xl, (BL, NUM_CLASSES), dtype=jnp.float32)
    out_l = jax.block_until_ready(out_program_forward(logits_l, w_rand, b_rand))
    ref_l = logits_l @ w_rand.T + b_rand
    assert out_l.shape == (BL, NUM_CLASSES)
    assert jnp.allclose(out_l, ref_l, atol=1e-4), "mismatch (general, ragged/tiled)"

    print("KERNEL_OK")
</pallas_src>

<mosaic_0001>
module attributes {stable_mosaic.version = 11 : i64} {
  func.func @copy_kernel(%arg0: i32, %arg1: memref<5x128xf32, #tpu.memory_space<vmem>>, %arg2: memref<5x128xf32, #tpu.memory_space<vmem>>) attributes {dimension_semantics = [#tpu.dimension_semantics<parallel>], iteration_bounds = array<i64: 1>, scalar_prefetch = 0 : i64, scratch_operands = 0 : i64, tpu.core_type = #tpu.core_type<tc>, window_params = [{transform_indices = @transform_0, window_bounds = array<i64: 5, 128>}, {transform_indices = @transform_1, window_bounds = array<i64: 5, 128>}]} {
    %c0 = arith.constant 0 : index
    %c0_0 = arith.constant 0 : index
    %0 = vector.load %arg1[%c0, %c0_0] : memref<5x128xf32, #tpu.memory_space<vmem>>, vector<5x128xf32>
    %c0_1 = arith.constant 0 : index
    %c0_2 = arith.constant 0 : index
    %1 = vector.load %arg2[%c0_1, %c0_2] : memref<5x128xf32, #tpu.memory_space<vmem>>, vector<5x128xf32>
    tpu.vector_store %arg2[%c0_1, %c0_2], %0 {strides = array<i32>} : memref<5x128xf32, #tpu.memory_space<vmem>>, vector<5x128xf32>,
    return
  }
  func.func @transform_0(%arg0: i32) -> (i32, i32) {
    %c0_i32 = arith.constant 0 : i32
    %c0_i32_0 = arith.constant 0 : i32
    return %arg0, %c0_i32 : i32, i32
  }
  func.func @transform_1(%arg0: i32) -> (i32, i32) {
    %c0_i32 = arith.constant 0 : i32
    %c0_i32_0 = arith.constant 0 : i32
    return %arg0, %c0_i32 : i32, i32
  }
}

</mosaic_0001>

<llo_original>
// kernel: tpu_custom_call.1
$region0: #{tpu_custom_call.1}
  #allocation0 [shape = 'u32[]', space=smem, size = 0x4, offset = 0x4, fixed_abs, tag = 'smem constant byte address 0x4 - core index']
  #allocation1 [shape = 'u32[144,128]{1,0:T(1,128)}', space=vmem, size = 0x12000, scoped, tag = 'internal scratch']
  %s0 = inlined_call_operand.hbm [shape: f32[5,128], index: 0, kind: input, shape index: {}]
  %s1 = inlined_call_operand.hbm [shape: f32[5,128], index: 1, kind: output, shape index: {}]
  %s2 = sld [smem:[#allocation0]]
  $region18: #{tpu_custom_call.1} parent=0
    _
  %s4 = ssub.s32 1, %s2
  %s5 = scalar_select 0, %s4, %s2
  $region1: #{tpu_custom_call.1} parent=0
    #allocation2 [shape = 'u8[4096]{0}', space=vmem, size = 0x1000, scoped, tag = 'input window, operand 0, single buffered']
    #allocation3 [shape = 's32[1]{0}', space=sflag, size = 0x4, scoped, tag = 'scoped memory for tpu_custom_call.1']
    #allocation4 [shape = 's32[1]{0}', space=sflag, size = 0x4, scoped, tag = 'scoped memory for tpu_custom_call.1']
    #allocation5 [shape = 'u8[4096]{0}', space=vmem, size = 0x1000, scoped, tag = 'output window, operand 0, single buffered']
    %6 = vsyncpa [#allocation3], 0
    %7 = vsyncpa [#allocation4], 0
    // Predicated region
    $region2: #{tpu_custom_call.1} parent=1 // pred_check
      _
    $region3: #{tpu_custom_call.1} parent=1 // pred_check_branch
      %9 = sbr.rel (0) target = $region5
    $region4: #{tpu_custom_call.1} parent=1 // pred_region
      %s11 = ssub.s32 128, 128
      %12 = vsyncadd [#allocation3], %s11
      %s14 = sshll.u32 [#allocation2], 4
      %s15 = int_to_ptr.vmem [resolvable:$true] %s14
      %17 = dma.hbm_to_vmem [thread:$0]  %s0, 128, %s15, [#allocation3]
    $region5: #{tpu_custom_call.1} parent=1 // pred_fallthru
      _
    // Predicated region
    $region6: #{tpu_custom_call.1} parent=1 // pred_check
      _
    $region7: #{tpu_custom_call.1} parent=1 // pred_check_branch
      %19 = sbr.rel (0) target = $region9
    $region8: #{tpu_custom_call.1} parent=1 // pred_region
      %20 = dma.done [#allocation3], 128
    $region9: #{tpu_custom_call.1} parent=1 // pred_fallthru
      _
    %v21 = vld [vmem:[#allocation2] sm:$0x1f]
    %22 = vst [vmem:[#allocation5] sm:$0x1f] %v21
    // Predicated region
    $region10: #{tpu_custom_call.1} parent=1 // pred_check
      _
    $region11: #{tpu_custom_call.1} parent=1 // pred_check_branch
      %24 = sbr.rel (0) target = $region13
    $region12: #{tpu_custom_call.1} parent=1 // pred_region
      %s26 = ssub.s32 128, 128
      %27 = vsyncadd [#allocation4], %s26
      %s29 = sshll.u32 [#allocation5], 4
      %s30 = int_to_ptr.vmem [resolvable:$true] %s29
      %32 = dma.vmem_to_hbm [thread:$0]  %s30, 128, %s1, [#allocation4]
    $region13: #{tpu_custom_call.1} parent=1 // pred_fallthru
      _
    // Predicated region
    $region14: #{tpu_custom_call.1} parent=1 // pred_check
      _
    $region15: #{tpu_custom_call.1} parent=1 // pred_check_branch
      %34 = sbr.rel (0) target = $region17
    $region16: #{tpu_custom_call.1} parent=1 // pred_region
      %35 = dma.done [#allocation4], 128
    $region17: #{tpu_custom_call.1} parent=1 // pred_fallthru
      _
    %36 = vsyncpa [#allocation3], 1
    %37 = vsyncpa [#allocation4], 1

</llo_original>
